<compile_context>
chip_gen: v5e
topology: v5e:2x2
jax: 0.10.0
libtpu: 0.0.40
codegen_flags: <defaults>
</compile_context>

<pallas_src>
import math

import jax
import jax.numpy as jnp
from jax import lax
from jax.experimental import pallas as pl
from jax.experimental.pallas import tpu as pltpu

_HALF_PI = math.pi / 2.0


def _make_kernel(sel_rows: int):
    """sel_rows == 0: x block is (TB, 1); broadcast against the (1, W) tables.
    sel_rows  > 0 : x block is (TB, sel_rows); expand across lanes with a tiny
                    matmul against the precomputed 0/1 selection rows."""

    def kernel(x_ref, tab_ref, out_ref):
        x = x_ref[...]                                            # (TB, 1|K) f32
        if sel_rows:
            sel = tab_ref[0:sel_rows, :]                          # (K, W) 0/1
            xw = jnp.dot(x, sel, preferred_element_type=jnp.float32)  # (TB, W)
        else:
            xw = x                                                # (TB, 1) bcast
        freq = tab_ref[sel_rows:sel_rows + 1, :]                  # (1, W)
        phase = tab_ref[sel_rows + 1:sel_rows + 2, :]             # (1, W)
        # cos(t) == sin(t + pi/2): one trig evaluation per output element,
        # single full-width lane-dense store.
        out_ref[...] = jnp.sin(xw * freq + phase).astype(out_ref.dtype)

    return kernel


def diffusion_sinusoidal_pos_emb(
    x: jax.Array,
    dim: int,
    *,
    out_dtype=jnp.float32,
    block_b: int | None = None,
) -> jax.Array:
    """x: (B,) array of diffusion timesteps -> (B, dim) sinusoidal embeddings.

    out_dtype=jnp.bfloat16 (math stays f32) is recommended when the consumer
    accepts it: the kernel is HBM-write-bound at f32 on v5e/v6e.
    """
    if dim % 2 != 0:
        raise ValueError("dim must be even")
    if dim < 4:
        raise ValueError("dim must be >= 4 (half_dim - 1 == 0 divides by zero)")
    half_dim = dim // 2
    scale = math.log(10000.0) / (half_dim - 1)
    out_dtype = jnp.dtype(out_dtype)
    b = int(x.shape[0])

    # --- lane packing for small dims: G batch rows per 128-wide output row ---
    if dim < 128 and 128 % dim == 0:
        G, W = 128 // dim, 128
        K = ((G + 7) // 8) * 8            # padded contraction for the expansion
    else:
        G, W, K = 1, dim, 0
    # TODO(synk): dims < 128 that don't divide 128 fall back to a narrow
    # (masked-store) output block; correct but slower per byte.

    n_rows = pl.cdiv(b, G)                # rows of the (packed) output
    sub = 8 if out_dtype.itemsize >= 4 else 16   # sublane tile (bf16 packs 16)

    # --- row-tile sizing: ~2 MiB blocks; guarantee >= 2 grid steps if possible ---
    if block_b is None:
        rows = (2 * 1024 * 1024) // max(1, W * out_dtype.itemsize)
        block_rows = min(1024, max(sub, (rows // sub) * sub))
        if n_rows >= 2 * sub:             # let both v7x TensorCores get work
            block_rows = min(block_rows, max(sub, ((n_rows // 2) // sub) * sub))
    else:
        block_rows = max(sub, ((max(1, int(block_b)) // G) // sub) * sub)
    block_rows = min(block_rows, pl.cdiv(n_rows, sub) * sub)
    block_rows = max(sub, (block_rows // sub) * sub)

    n_rows_pad = pl.cdiv(n_rows, block_rows) * block_rows
    b_pad = n_rows_pad * G
    grid = (n_rows_pad // block_rows,)

    # --- inputs: packed timesteps + precomputed per-column tables ---
    xf = x.astype(jnp.float32).reshape(-1)
    if b_pad != b:
        xf = jnp.pad(xf, (0, b_pad - b))
    if G > 1:
        xin = xf.reshape(n_rows_pad, G)
        if K > G:
            xin = jnp.pad(xin, ((0, 0), (0, K - G)))
        x_cols = K
    else:
        xin = xf.reshape(n_rows_pad, 1)
        x_cols = 1

    col = jnp.arange(W, dtype=jnp.int32)
    c = col % dim
    is_cos = c >= half_dim
    idx = jnp.where(is_cos, c - half_dim, c).astype(jnp.float32)
    freq = jnp.exp(idx * (-scale))[None, :]                            # (1, W)
    phase = jnp.where(is_cos, _HALF_PI, 0.0).astype(jnp.float32)[None, :]
    if G > 1:
        sel = (jnp.arange(K, dtype=jnp.int32)[:, None] == (col // dim)[None, :])
        tab = jnp.concatenate([sel.astype(jnp.float32), freq, phase], axis=0)
    else:
        tab = jnp.concatenate([freq, phase], axis=0)
    tab_rows = int(tab.shape[0])

    # --- VMEM budget (lane-padded, double-buffered) clamped to 32 MiB ---
    w_pad = pl.cdiv(W, 128) * 128
    tab_sub = pl.cdiv(tab_rows, 8) * 8
    need = (2 * block_rows * 128 * 4                       # x tile (lane-padded)
            + 2 * tab_sub * w_pad * 4                      # resident tables
            + 2 * block_rows * w_pad * out_dtype.itemsize  # output tile
            + 3 * block_rows * w_pad * 4)                  # f32 intermediates
    vmem_limit = int(min(max(need + (1 << 20), 4 << 20), 32 << 20))

    out = pl.pallas_call(
        _make_kernel(K),
        out_shape=jax.ShapeDtypeStruct((n_rows_pad, W), out_dtype),
        grid=grid,
        in_specs=[
            pl.BlockSpec((block_rows, x_cols), lambda i: (i, 0)),
            # constant block index -> tables DMA'd once and kept resident
            pl.BlockSpec((tab_rows, W), lambda i: (0, 0)),
        ],
        out_specs=pl.BlockSpec((block_rows, W), lambda i: (i, 0)),
        compiler_params=pltpu.CompilerParams(
            dimension_semantics=("parallel",),
            vmem_limit_bytes=vmem_limit,
        ),
    )(xin, tab)

    out = out.reshape(b_pad, dim)
    if b_pad != b:
        out = out[:b]
    return out


def _reference(x: jax.Array, dim: int) -> jax.Array:
    half_dim = dim // 2
    scale = math.log(10000.0) / (half_dim - 1)
    freq = jnp.exp(jnp.arange(half_dim, dtype=jnp.float32) * -scale)
    emb = x.astype(jnp.float32)[:, None] * freq[None, :]
    return jnp.concatenate([jnp.sin(emb), jnp.cos(emb)], axis=-1)


if __name__ == "__main__":
    key = jax.random.PRNGKey(0)
    cases = [
        # (B,   dim, block_b, out_dtype,     atol)
        (8,    32,  None,    jnp.float32,  1e-4),   # packed small-dim path (G=4)
        (130,  256, 64,      jnp.float32,  1e-4),   # aligned dim, padded batch, 3-step grid
        (16,   96,  None,    jnp.float32,  1e-4),   # small dim not dividing 128 (fallback)
        (64,   128, None,    jnp.bfloat16, 2e-2),   # bf16 output, 16-row sublane tiles
    ]
    for i, (B, D, bb, dt, tol) in enumerate(cases):
        key, sk = jax.random.split(key)
        xi = jax.random.uniform(sk, (B,), dtype=jnp.float32, minval=0.0, maxval=100.0)
        out = jax.block_until_ready(
            diffusion_sinusoidal_pos_emb(xi, D, out_dtype=dt, block_b=bb))
        ref = _reference(xi, D)
        assert out.shape == (B, D), f"bad shape (case {i})"
        assert jnp.allclose(out.astype(jnp.float32), ref, atol=tol, rtol=tol), \
            f"mismatch (case {i})"
    print("KERNEL_OK")
</pallas_src>

<mosaic_0001>
module attributes {stable_mosaic.version = 11 : i64} {
  func.func @kernel(%arg0: i32, %arg1: memref<8x8xf32, #tpu.memory_space<vmem>>, %arg2: memref<10x128xf32, #tpu.memory_space<vmem>>, %arg3: memref<8x128xf32, #tpu.memory_space<vmem>>) attributes {dimension_semantics = [#tpu.dimension_semantics<parallel>], iteration_bounds = array<i64: 1>, scalar_prefetch = 0 : i64, scratch_operands = 0 : i64, tpu.core_type = #tpu.core_type<tc>, window_params = [{transform_indices = @transform_0, window_bounds = array<i64: 8, 8>}, {pipeline_mode = #tpu.pipeline_mode<synchronous>, transform_indices = @transform_1, window_bounds = array<i64: 10, 128>}, {transform_indices = @transform_2, window_bounds = array<i64: 8, 128>}]} {
    %c0 = arith.constant 0 : index
    %c0_0 = arith.constant 0 : index
    %0 = vector.load %arg1[%c0, %c0_0] : memref<8x8xf32, #tpu.memory_space<vmem>>, vector<8x8xf32>
    %c0_1 = arith.constant 0 : index
    %c0_2 = arith.constant 0 : index
    %1 = vector.load %arg2[%c0_1, %c0_2] : memref<10x128xf32, #tpu.memory_space<vmem>>, vector<8x128xf32>
    %cst = arith.constant dense<0.000000e+00> : vector<8x128xf32>
    %2 = tpu.matmul %0, %1, %cst {dimension_numbers = #tpu.dot_dimension_numbers<[1], [0], [0], [1], [0, 0, 1, 1], [], []>} : vector<8x8xf32>, vector<8x128xf32>, vector<8x128xf32> -> vector<8x128xf32>
    %c8 = arith.constant 8 : index
    %c0_3 = arith.constant 0 : index
    %3 = vector.load %arg2[%c8, %c0_3] : memref<10x128xf32, #tpu.memory_space<vmem>>, vector<1x128xf32>
    %c9 = arith.constant 9 : index
    %c0_4 = arith.constant 0 : index
    %4 = vector.load %arg2[%c9, %c0_4] : memref<10x128xf32, #tpu.memory_space<vmem>>, vector<1x128xf32>
    %5 = vector.broadcast %3 : vector<1x128xf32> to vector<8x128xf32>
    %6 = arith.mulf %2, %5 : vector<8x128xf32>
    %7 = vector.broadcast %4 : vector<1x128xf32> to vector<8x128xf32>
    %8 = arith.addf %6, %7 : vector<8x128xf32>
    %9 = math.sin %8 : vector<8x128xf32>
    %c0_5 = arith.constant 0 : index
    %c0_6 = arith.constant 0 : index
    %10 = vector.load %arg3[%c0_5, %c0_6] : memref<8x128xf32, #tpu.memory_space<vmem>>, vector<8x128xf32>
    tpu.vector_store %arg3[%c0_5, %c0_6], %9 {strides = array<i32>} : memref<8x128xf32, #tpu.memory_space<vmem>>, vector<8x128xf32>,
    return
  }
  func.func @transform_0(%arg0: i32) -> (i32, i32) {
    %c0_i32 = arith.constant 0 : i32
    %c0_i32_0 = arith.constant 0 : i32
    return %arg0, %c0_i32 : i32, i32
  }
  func.func @transform_1(%arg0: i32) -> (i32, i32) {
    %c0_i32 = arith.constant 0 : i32
    %c0_i32_0 = arith.constant 0 : i32
    %c0_i32_1 = arith.constant 0 : i32
    return %c0_i32, %c0_i32_0 : i32, i32
  }
  func.func @transform_2(%arg0: i32) -> (i32, i32) {
    %c0_i32 = arith.constant 0 : i32
    %c0_i32_0 = arith.constant 0 : i32
    return %arg0, %c0_i32 : i32, i32
  }
}

</mosaic_0001>

<llo_original>
// kernel: tpu_custom_call.1
$region0: #{tpu_custom_call.1}
  #allocation0 [shape = 'u32[]', space=smem, size = 0x4, offset = 0x4, fixed_abs, tag = 'smem constant byte address 0x4 - core index']
  #allocation1 [shape = 'u32[72,128]{1,0:T(1,128)}', space=vmem, size = 0x9000, scoped, tag = 'internal scratch']
  %s0 = inlined_call_operand.hbm [shape: f32[8,8], index: 0, kind: input, shape index: {}]
  %s1 = inlined_call_operand.hbm [shape: f32[10,128], index: 1, kind: input, shape index: {}]
  %s2 = inlined_call_operand.hbm [shape: f32[8,128], index: 2, kind: output, shape index: {}]
  %s3 = sld [smem:[#allocation0]]
  $region26: #{tpu_custom_call.1} parent=0
    _
  %s5 = ssub.s32 1, %s3
  %s6 = scalar_select 0, %s5, %s3
  $region1: #{tpu_custom_call.1} parent=0
    #allocation2 [shape = 'u8[4096]{0}', space=vmem, size = 0x1000, scoped, tag = 'input window, operand 0, single buffered']
    #allocation3 [shape = 's32[1]{0}', space=sflag, size = 0x4, scoped, tag = 'scoped memory for tpu_custom_call.1']
    #allocation4 [shape = 's32[1]{0}', space=sflag, size = 0x4, scoped, tag = 'scoped memory for tpu_custom_call.1']
    #allocation5 [shape = 'u8[8192]{0}', space=vmem, size = 0x2000, scoped, tag = 'input window, operand 1, single buffered']
    #allocation6 [shape = 's32[1]{0}', space=sflag, size = 0x4, scoped, tag = 'scoped memory for tpu_custom_call.1']
    #allocation7 [shape = 'u8[4096]{0}', space=vmem, size = 0x1000, scoped, tag = 'output window, operand 0, single buffered']
    %7 = vsyncpa [#allocation3], 0
    %8 = vsyncpa [#allocation6], 0
    %9 = vsyncpa [#allocation4], 0
    // Predicated region
    $region2: #{tpu_custom_call.1} parent=1 // pred_check
      _
    $region3: #{tpu_custom_call.1} parent=1 // pred_check_branch
      %11 = sbr.rel (0) target = $region5
    $region4: #{tpu_custom_call.1} parent=1 // pred_region
      %13 = vsyncadd [#allocation3], 0
      %s15 = sshll.u32 %s0, 4
      %s16 = int_to_ptr.hbm [resolvable:$true] %s15
      %s17 = sshll.u32 [#allocation2], 4
      %s18 = int_to_ptr.vmem [resolvable:$true] %s17
      %20 = dma.hbm_to_vmem [thread:$0]  %s16, 128, %s18, [#allocation3]
    $region5: #{tpu_custom_call.1} parent=1 // pred_fallthru
      _
    // Predicated region
    $region6: #{tpu_custom_call.1} parent=1 // pred_check
      _
    $region7: #{tpu_custom_call.1} parent=1 // pred_check_branch
      %22 = sbr.rel (0) target = $region9
    $region8: #{tpu_custom_call.1} parent=1 // pred_region
      %24 = vsyncadd [#allocation6], 0
      %s25 = sshll.u32 %s1, 4
      %s26 = int_to_ptr.hbm [resolvable:$true] %s25
      %s27 = sshll.u32 [#allocation5], 4
      %s28 = int_to_ptr.vmem [resolvable:$true] %s27
      %33 = dma.hbm_to_vmem [thread:$0]  %s26, 256, %s28, [#allocation6], 128, 128, 8
    $region9: #{tpu_custom_call.1} parent=1 // pred_fallthru
      _
    // Predicated region
    $region10: #{tpu_custom_call.1} parent=1 // pred_check
      _
    $region11: #{tpu_custom_call.1} parent=1 // pred_check_branch
      %35 = sbr.rel (0) target = $region13
    $region12: #{tpu_custom_call.1} parent=1 // pred_region
      %37 = dma.done [#allocation3], 128
    $region13: #{tpu_custom_call.1} parent=1 // pred_fallthru
      _
    // Predicated region
    $region14: #{tpu_custom_call.1} parent=1 // pred_check
      _
    $region15: #{tpu_custom_call.1} parent=1 // pred_check_branch
      %39 = sbr.rel (0) target = $region17
    $region16: #{tpu_custom_call.1} parent=1 // pred_region
      %41 = dma.done [#allocation6], 256
    $region17: #{tpu_custom_call.1} parent=1 // pred_fallthru
      _
    %v42 = vld [vmem:[#allocation2] sm:$0xff]
    %v43 = vld [vmem:[#allocation5] sm:$0xff]
    %vm44 = vcmask 64512
    %v46 = vsel %vm44, %v42, 0
    %48 = vmatpush.msra.mxu0 0.0
    %49 = vmatpush.msra.mxu0 0.0
    %50 = vmatpush.msra.mxu0 0.0
    %51 = vmatpush.msra.mxu0 0.0
    %52 = vmatpush.msra.mxu0 0.0
    %53 = vmatpush.msra.mxu0 0.0
    %54 = vmatpush.msra.mxu0 0.0
    %55 = vmatpush.msra.mxu0 0.0
    %56 = vmatpush.msra.mxu0 0.0
    %57 = vmatpush.msra.mxu0 0.0
    %58 = vmatpush.msra.mxu0 0.0
    %59 = vmatpush.msra.mxu0 0.0
    %60 = vmatpush.msra.mxu0 0.0
    %61 = vmatpush.msra.mxu0 0.0
    %62 = vmatpush.msra.mxu0 0.0
    %63 = vmatpush.msra.mxu0 %v43
    %64 = vmatmul.f32.gmra.mxu0 %v46
    %v65 = vpop.f32.mrf.mxu0
    %v66 = vadd.f32 0.0, %v65
    %67 = vdwg.mxu0
    %v68 = vld [vmem:[#allocation5 + $0x8] sm:$0x1]
    %v69 = vld [vmem:[#allocation5 + $0x9] sm:$0x1]
    %v70 = vperm.slane %v68, 0
    %v71 = vmul.f32 %v66, %v70
    %v72 = vperm.slane %v69, 0
    %v73 = vadd.f32 %v71, %v72
    %v74 = vand.u32 2147483647, %v73
    %vm75 = vcmp.le.f32.partialorder %v74, 0.7853982
    %vm76 = vcmp.lt.s32.totalorder %v73, 0
    %v77 = vand.u32 %v73, 2139095040
    %v78 = vshrl.u32 %v77, 23
    %v79 = vsub.s32 %v78, 127
    %v80 = vand.u32 2147483647, %v73
    %v81 = vand.u32 %v80, 8388607
    %v82 = vor.u32 %v81, 8388608
    %v83 = vsub.s32 0, %v82
    %v84 = vadd.s32 %v79, 1
    %vm85 = vcmp.gt.s32.totalorder %v84, 0
    %v86 = vsel %vm85, %v84, 0
    %v87 = vshrl.u32 %v86, 5
    %v88 = vand.u32 %v86, 31
    %v89 = vsub.s32 32, %v88
    %v90 = vshrl.u32 683565275, %v89
    %v91 = vshll.u32 683565275, %v88
    %v92 = vshrl.u32 2475754826, %v89
    %v93 = vor.u32 %v91, %v92
    %v94 = vshll.u32 2475754826, %v88
    %v95 = vshrl.u32 2131351028, %v89
    %v96 = vor.u32 %v94, %v95
    %v97 = vshll.u32 2131351028, %v88
    %v98 = vshrl.u32 2102212464, %v89
    %v99 = vor.u32 %v97, %v98
    %v100 = vshll.u32 2102212464, %v88
    %v101 = vshrl.u32 920167782, %v89
    %v102 = vor.u32 %v100, %v101
    %v103 = vshll.u32 920167782, %v88
    %v104 = vshrl.u32 1326507024, %v89
    %v105 = vor.u32 %v103, %v104
    %vm106 = vcmp.lt.s32.totalorder %v87, 1
    %vm107 = vcmp.lt.s32.totalorder %v87, 2
    %vm108 = vcmp.lt.s32.totalorder %v87, 3
    %vm109 = vcmp.lt.s32.totalorder %v87, 4
    %v110 = vsel %vm106, %v90, %v93
    %v111 = vsel %vm109, %v99, 2102212464
    %v112 = vsel %vm108, %v96, %v111
    %v113 = vsel %vm107, %v110, %v112
    %v114 = vsel %vm106, %v93, %v96
    %v115 = vsel %vm109, %v102, 920167782
    %v116 = vsel %vm108, %v99, %v115
    %v117 = vsel %vm107, %v114, %v116
    %v118 = vsel %vm106, %v96, %v99
    %v119 = vsel %vm109, %v105, 1326507024
    %v120 = vsel %vm108, %v102, %v119
    %v121 = vsel %vm107, %v118, %v120
    %v122 = vshll.u32 %v82, 8
    %v123 = vand.u32 %v122, 65535
    %v124 = vshrl.u32 %v122, 16
    %v125 = vand.u32 %v121, 65535
    %v126 = vshrl.u32 %v121, 16
    %v127 = vmul.u32 %v123, %v125
    %v128 = vmul.u32 %v123, %v126
    %v129 = vmul.u32 %v124, %v125
    %v130 = vmul.u32 %v124, %v126
    %v131 = vshll.u32 %v128, 16
    %v132 = vshrl.u32 %v128, 16
    %v133 = vshll.u32 %v129, 16
    %v134 = vshrl.u32 %v129, 16
    %vm135 = vc.u32 %v127, %v131
    %v136 = vsel %vm135, 1, 0
    %v137 = vadd.s32 %v127, %v131
    %v138 = vadd.s32 %v130, %v136
    %vm139 = vc.u32 %v137, %v133
    %v140 = vsel %vm139, 1, 0
    %v141 = vadd.s32 %v137, %v133
    %v142 = vadd.s32 %v138, %v140
    %v143 = vadd.s32 %v142, %v132
    %v144 = vadd.s32 %v143, %v134
    %v145 = vand.u32 %v122, 65535
    %v146 = vshrl.u32 %v122, 16
    %v147 = vand.u32 %v117, 65535
    %v148 = vshrl.u32 %v117, 16
    %v149 = vmul.u32 %v145, %v147
    %v150 = vmul.u32 %v145, %v148
    %v151 = vmul.u32 %v146, %v147
    %v152 = vmul.u32 %v146, %v148
    %v153 = vshll.u32 %v150, 16
    %v154 = vshrl.u32 %v150, 16
    %v155 = vshll.u32 %v151, 16
    %v156 = vshrl.u32 %v151, 16
    %vm157 = vc.u32 %v149, %v153
    %v158 = vsel %vm157, 1, 0
    %v159 = vadd.s32 %v149, %v153
    %v160 = vadd.s32 %v152, %v158
    %vm161 = vc.u32 %v159, %v155
    %v162 = vsel %vm161, 1, 0
    %v163 = vadd.s32 %v159, %v155
    %v164 = vadd.s32 %v160, %v162
    %v165 = vadd.s32 %v164, %v154
    %v166 = vadd.s32 %v165, %v156
    %v167 = vmul.u32 %v122, %v113
    %v168 = vadd.s32 %v144, %v163
    %vm169 = vc.u32 %v144, %v163
    %v170 = vadd.s32 %v166, 1
    %v171 = vsel %vm169, %v170, %v166
    %v172 = vadd.s32 %v167, %v171
    %v173 = vadd.s32 %v172, 536870912
    %v174 = vshrl.u32 %v173, 30
    %v175 = vshll.u32 %v174, 30
    %v176 = vsub.s32 %v172, %v175
    %vm177 = vcmp.lt.s32.totalorder %v176, 0
    %v178 = vsub.s32 0, %v176
    %v179 = vsel %vm177, %v178, %v176
    %v180 = vclz %v179
    %v181 = vsub.s32 %v180, 2
    %vm182 = vcmp.gt.s32.totalorder 0, %v181
    %v183 = vsel %vm182, 0, %v181
    %v184 = vsub.s32 32, %v183
    %v185 = vshll.u32 %v176, %v183
    %v186 = vshrl.u32 %v168, %v184
    %v187 = vor.u32 %v185, %v186
    %v188 = vsub.s32 4294967266, %v183
    %v189 = vadd.s32 %v188, 127
    %v190 = vshll.u32 %v189, 23
    %v191 = vor.u32 4788187, %v190
    %v192 = vand.u32 2147483647, %v191
    %v194 = vcvt.s32.f32 %v187
    %v195 = vmul.f32 %v194, %v192
    %v196 = vxor.u32 %v195, 2147483648
    %v197 = vsel %vm76, %v196, %v195
    %v198 = vsub.s32 4, %v174
    %v199 = vsel %vm76, %v198, %v174
    %v200 = vsel %vm75, %v73, %v197
    %v201 = vsel %vm75, 0, %v199
    %v202 = vmul.f32 %v200, %v200
    %v203 = vmul.f32 %v202, -0.001358992
    %v204 = vadd.f32 %v203, 0.041655596
    %v205 = vmul.f32 %v202, %v204
    %v206 = vadd.f32 %v205, -0.4999988
    %v207 = vmul.f32 %v202, %v206
    %v208 = vadd.f32 1.0, %v207
    %v209 = vmul.f32 %v200, %v200
    %v210 = vmul.f32 %v209, -0.00019511016
    %v211 = vadd.f32 %v210, 0.008332121
    %v212 = vmul.f32 %v209, %v211
    %v213 = vadd.f32 %v212, -0.16666654
    %v214 = vmul.f32 %v209, %v213
    %v215 = vadd.f32 %v214, 1.0
    %v216 = vmul.f32 %v215, %v200
    %vm217 = vweird.f32 %v73
    %v218 = vadd.s32 %v201, 3
    %v219 = vand.u32 %v218, 3
    %vm220 = vcmp.lt.s32.totalorder %v219, 2
    %vm221 = vcmp.eq.s32.totalorder %v219, 0
    %v222 = vxor.u32 %v216, 2147483648
    %v223 = vsel %vm221, %v208, %v222
    %vm224 = vcmp.eq.s32.totalorder %v219, 2
    %v225 = vxor.u32 %v208, 2147483648
    %v226 = vsel %vm224, %v225, %v216
    %v227 = vsel %vm220, %v223, %v226
    %v228 = vsel %vm217, nan, %v227
    %229 = vst [vmem:[#allocation7] sm:$0xff] %v228
    // Predicated region
    $region18: #{tpu_custom_call.1} parent=1 // pred_check
      _
    $region19: #{tpu_custom_call.1} parent=1 // pred_check_branch
      %231 = sbr.rel (0) target = $region21
    $region20: #{tpu_custom_call.1} parent=1 // pred_region
      %233 = vsyncadd [#allocation4], 0
      %s235 = sshll.u32 [#allocation7], 4
      %s236 = int_to_ptr.vmem [resolvable:$true] %s235
      %s237 = sshll.u32 %s2, 4
      %s238 = int_to_ptr.hbm [resolvable:$true] %s237
      %240 = dma.vmem_to_hbm [thread:$0]  %s236, 128, %s238, [#allocation4]
    $region21: #{tpu_custom_call.1} parent=1 // pred_fallthru
      _
    // Predicated region
    $region22: #{tpu_custom_call.1} parent=1 // pred_check
      _
    $region23: #{tpu_custom_call.1} parent=1 // pred_check_branch
      %242 = sbr.rel (0) target = $region25
    $region24: #{tpu_custom_call.1} parent=1 // pred_region
      %244 = dma.done [#allocation4], 128
    $region25: #{tpu_custom_call.1} parent=1 // pred_fallthru
      _
    %245 = vsyncpa [#allocation3], 1
    %246 = vsyncpa [#allocation6], 1
    %247 = vsyncpa [#allocation4], 1

</llo_original>
